<compile_context>
chip_gen: v6e
topology: v6e:2x2x1
jax: 0.10.0
libtpu: 0.0.40
codegen_flags: <defaults>
</compile_context>

<pallas_src>
import math
from functools import partial

import jax
import jax.numpy as jnp
from jax.experimental import pallas as pl
from jax.experimental.pallas import tpu as pltpu


def _round_up(x, m):
    return ((x + m - 1) // m) * m


def _cdiv(a, b):
    return (a + b - 1) // b


# --------------------------------------------------------------------------- #
# Kernel: one batch tile per grid step.                                        #
# --------------------------------------------------------------------------- #
def _dpi_kernel(conf_s_ref, key_t_ref, wq_ref, bias_ref, fuse_ref, out_ref):
    # query = fuse @ (Wq^T * 1/sqrt(con_size))                       (tb, 256)
    query = jnp.dot(fuse_ref[...], wq_ref[...],
                    preferred_element_type=jnp.float32)

    # scores = query @ key^T; key is passed pre-transposed (256, N_pad) so this
    # is the natural [M,K]x[K,N] MXU form (no in-kernel transpose).
    mid = jnp.dot(query.astype(key_t_ref.dtype), key_t_ref[...],
                  preferred_element_type=jnp.float32)              # (tb, N_pad)

    # Additive mask: 0 on real confounder columns, -1e30 on padded columns.
    mid = mid + bias_ref[...]

    # Softmax over the confounder axis (exp + approx reciprocal on the EUP).
    m = jnp.max(mid, axis=-1, keepdims=True)
    e = jnp.exp(mid - m)
    denom = jnp.sum(e, axis=-1, keepdims=True)
    attn = e * pl.reciprocal(denom, approx=True)                   # (tb, N_pad)

    # fin[b, d] = sum_n attn[b, n] * (prob[n] * conf[n, d])
    out_ref[...] = jnp.dot(attn.astype(conf_s_ref.dtype), conf_s_ref[...],
                           preferred_element_type=jnp.float32)     # (tb, C_pad)


# --------------------------------------------------------------------------- #
# Batch-invariant precompute (cache this across calls: it only depends on the  #
# confounder set, the priors and the Linear weights).                          #
# --------------------------------------------------------------------------- #
def prepare_intervention_params(confounder_set, probabilities, wq_t, wk_t,
                                *, matmul_dtype=jnp.bfloat16):
    n_conf, con_size = confounder_set.shape
    fuse_size, d_qk = wq_t.shape
    assert wk_t.shape == (con_size, d_qk)
    assert probabilities.shape == (n_conf, 1)

    # Lane-dense padding (zero pad + additive mask keeps the math identical).
    # TODO(synk): when n_conf, con_size >> 256, pad the contraction dims to
    # multiples of 256 to fill the full MXU K-width on v6e/v7x.
    n_pad = _round_up(n_conf, 128)
    c_pad = _round_up(con_size, 128)
    f_pad = _round_up(fuse_size, 128)

    scale = 1.0 / math.sqrt(con_size)

    # Hoisted out of the grid loop:
    key_t = (confounder_set @ wk_t).T                 # (256, N)  key projection, once
    conf_scaled = probabilities * confounder_set      # (N, C)    priors folded in

    key_t_p = jnp.pad(key_t, ((0, 0), (0, n_pad - n_conf))).astype(matmul_dtype)
    conf_s_p = jnp.pad(conf_scaled,
                       ((0, n_pad - n_conf),
                        (0, c_pad - con_size))).astype(matmul_dtype)
    wq_p = jnp.pad(wq_t.astype(jnp.float32) * jnp.float32(scale),
                   ((0, f_pad - fuse_size), (0, 0))).astype(matmul_dtype)

    bias = jnp.where(jnp.arange(n_pad) < n_conf, 0.0, -1e30)
    bias = bias.astype(jnp.float32).reshape(1, n_pad)

    return dict(conf_s=conf_s_p, key_t=key_t_p, wq=wq_p, bias=bias,
                n_conf=n_conf, con_size=con_size, fuse_size=fuse_size,
                d_qk=d_qk, matmul_dtype=matmul_dtype)


# --------------------------------------------------------------------------- #
# Per-call apply (only fuse_rep changes between calls).                        #
# --------------------------------------------------------------------------- #
def apply_intervention(params, fuse_rep):
    batch, fuse_size = fuse_rep.shape
    assert fuse_size == params["fuse_size"]

    conf_s = params["conf_s"]
    key_t = params["key_t"]
    wq = params["wq"]
    bias = params["bias"]
    con_size = params["con_size"]
    mm_dtype = params["matmul_dtype"]

    n_pad, c_pad = conf_s.shape
    f_pad, d_qk = wq.shape

    # Batch tiling: >= 2 grid steps once the batch is non-trivial (both v7x
    # TensorCores get work on the "parallel" axis), tile b_pad tightly so the
    # trailing tile is never mostly padding, cap tb to bound per-step VMEM.
    b8 = _round_up(batch, 8)
    if b8 <= 8:
        tb = b8
    else:
        tb = min(_round_up(_cdiv(b8, 2), 8), 128)
    b_pad = _round_up(batch, tb)

    fuse_p = jnp.pad(fuse_rep, ((0, b_pad - batch),
                                (0, f_pad - fuse_size))).astype(mm_dtype)

    # Explicit scoped-VMEM budget: resident single-buffered operands + double-
    # buffered batch tiles + f32 intermediates, with 2x headroom, clamped to
    # the smallest physical VMEM (v7x: 64 MiB).
    isz = jnp.dtype(mm_dtype).itemsize
    resident = (n_pad * c_pad + d_qk * n_pad + f_pad * d_qk) * isz + n_pad * 4
    per_step = (2 * tb * f_pad * isz            # fuse tile, double-buffered
                + 2 * tb * c_pad * 4            # output tile, double-buffered
                + tb * (d_qk + 2 * n_pad) * 4)  # query / scores intermediates
    vmem_limit = int(min(max(2 * (resident + per_step), 8 * 1024 * 1024),
                         64 * 1024 * 1024))

    def resident_spec(shape):
        # Constant index_map -> block never changes; single-buffer it.
        return pl.BlockSpec(shape, lambda i: (0, 0),
                            pipeline_mode=pl.Buffered(1))

    out_p = pl.pallas_call(
        _dpi_kernel,
        out_shape=jax.ShapeDtypeStruct((b_pad, c_pad), jnp.float32),
        grid=(b_pad // tb,),
        in_specs=[
            resident_spec((n_pad, c_pad)),                 # prob * conf
            resident_spec((d_qk, n_pad)),                  # key^T
            resident_spec((f_pad, d_qk)),                  # Wq^T * scale
            resident_spec((1, n_pad)),                     # softmax pad mask
            pl.BlockSpec((tb, f_pad), lambda i: (i, 0)),   # fuse rep (batch-tiled)
        ],
        out_specs=pl.BlockSpec((tb, c_pad), lambda i: (i, 0)),
        compiler_params=pltpu.CompilerParams(
            dimension_semantics=("parallel",),
            vmem_limit_bytes=vmem_limit,
        ),
    )(conf_s, key_t, wq, bias, fuse_p)

    return out_p[:batch, :con_size]


def dot_product_intervention(confounder_set, fuse_rep, probabilities, wq_t, wk_t,
                             *, matmul_dtype=jnp.bfloat16):
    """JAX/Pallas equivalent of PyTorch dot_product_intervention.forward.

    confounder_set : (N, con_size), fuse_rep : (B, fuse_size),
    probabilities  : (N, 1), wq_t : (fuse_size, 256) == query.weight.T,
    wk_t : (con_size, 256) == key.weight.T.  Returns (B, con_size) float32.
    """
    params = prepare_intervention_params(confounder_set, probabilities,
                                         wq_t, wk_t, matmul_dtype=matmul_dtype)
    return apply_intervention(params, fuse_rep)


# --------------------------------------------------------------------------- #
# Pure-JAX reference (mirrors the PyTorch forward exactly, in f32).            #
# --------------------------------------------------------------------------- #
def _reference(confounder_set, fuse_rep, probabilities, wq_t, wk_t):
    con_size = confounder_set.shape[1]
    query = fuse_rep @ wq_t
    key = confounder_set @ wk_t
    mid = (query @ key.T) / math.sqrt(con_size)
    attn = jax.nn.softmax(mid, axis=-1)
    attn = attn[:, :, None]                                    # (B, N, 1)
    prod = attn * confounder_set[None] * probabilities[None]   # (B, N, C)
    return prod.sum(axis=1)


if __name__ == "__main__":
    # Small, deterministic problem sizes consistent with the module.
    B = 8           # batch of fuse representations
    N = 16          # number of confounders in the set
    CON_SIZE = 32   # confounder feature dim
    FUSE_SIZE = 32  # fuse representation dim

    key = jax.random.PRNGKey(0)
    k1, k2, k3, k4, k5 = jax.random.split(key, 5)

    confounder_set = jax.random.normal(k1, (N, CON_SIZE), dtype=jnp.float32)
    fuse_rep = jax.random.normal(k2, (B, FUSE_SIZE), dtype=jnp.float32)
    probs = jax.nn.softmax(jax.random.normal(k3, (N,)), axis=0).reshape(N, 1)

    # Deterministic "nn.Linear(bias=False)"-style init, stored pre-transposed (in, out).
    bq = 1.0 / math.sqrt(FUSE_SIZE)
    bk = 1.0 / math.sqrt(CON_SIZE)
    wq_t = jax.random.uniform(k4, (FUSE_SIZE, 256), minval=-bq, maxval=bq, dtype=jnp.float32)
    wk_t = jax.random.uniform(k5, (CON_SIZE, 256), minval=-bk, maxval=bk, dtype=jnp.float32)

    fin = dot_product_intervention(confounder_set, fuse_rep, probs, wq_t, wk_t)
    fin = jax.block_until_ready(fin)

    ref = _reference(confounder_set, fuse_rep, probs, wq_t, wk_t)
    assert fin.shape == (B, CON_SIZE)
    # Tolerance covers bf16 MXU operands (f32 accumulation / f32 softmax) and
    # the EUP approx-reciprocal in the softmax normalization.
    err = float(jnp.max(jnp.abs(fin - ref)))
    assert jnp.allclose(fin, ref, atol=1e-2, rtol=1e-2), err

    print("KERNEL_OK")
</pallas_src>

<mosaic_0001>
module attributes {stable_mosaic.version = 11 : i64} {
  func.func @_dpi_kernel(%arg0: i32, %arg1: memref<128x128xbf16, #tpu.memory_space<vmem>>, %arg2: memref<256x128xbf16, #tpu.memory_space<vmem>>, %arg3: memref<128x256xbf16, #tpu.memory_space<vmem>>, %arg4: memref<1x128xf32, #tpu.memory_space<vmem>>, %arg5: memref<8x128xbf16, #tpu.memory_space<vmem>>, %arg6: memref<8x128xf32, #tpu.memory_space<vmem>>) attributes {dimension_semantics = [#tpu.dimension_semantics<parallel>], iteration_bounds = array<i64: 1>, scalar_prefetch = 0 : i64, scratch_operands = 0 : i64, tpu.core_type = #tpu.core_type<tc>, window_params = [{pipeline_mode = #tpu.pipeline_mode<synchronous>, transform_indices = @transform_0, window_bounds = array<i64: 128, 128>}, {pipeline_mode = #tpu.pipeline_mode<synchronous>, transform_indices = @transform_1, window_bounds = array<i64: 256, 128>}, {pipeline_mode = #tpu.pipeline_mode<synchronous>, transform_indices = @transform_2, window_bounds = array<i64: 128, 256>}, {pipeline_mode = #tpu.pipeline_mode<synchronous>, transform_indices = @transform_3, window_bounds = array<i64: 1, 128>}, {transform_indices = @transform_4, window_bounds = array<i64: 8, 128>}, {transform_indices = @transform_5, window_bounds = array<i64: 8, 128>}]} {
    %c0 = arith.constant 0 : index
    %c0_0 = arith.constant 0 : index
    %0 = vector.load %arg5[%c0, %c0_0] : memref<8x128xbf16, #tpu.memory_space<vmem>>, vector<8x128xbf16>
    %c0_1 = arith.constant 0 : index
    %c0_2 = arith.constant 0 : index
    %1 = vector.load %arg3[%c0_1, %c0_2] : memref<128x256xbf16, #tpu.memory_space<vmem>>, vector<128x256xbf16>
    %cst = arith.constant dense<0.000000e+00> : vector<8x256xf32>
    %2 = tpu.matmul %0, %1, %cst {dimension_numbers = #tpu.dot_dimension_numbers<[1], [0], [0], [1], [0, 0, 1, 1], [], []>} : vector<8x128xbf16>, vector<128x256xbf16>, vector<8x256xf32> -> vector<8x256xf32>
    %3 = arith.truncf %2 : vector<8x256xf32> to vector<8x256xbf16>
    %c0_3 = arith.constant 0 : index
    %c0_4 = arith.constant 0 : index
    %4 = vector.load %arg2[%c0_3, %c0_4] : memref<256x128xbf16, #tpu.memory_space<vmem>>, vector<256x128xbf16>
    %cst_5 = arith.constant dense<0.000000e+00> : vector<8x128xf32>
    %5 = tpu.matmul %3, %4, %cst_5 {dimension_numbers = #tpu.dot_dimension_numbers<[1], [0], [0], [1], [0, 0, 1, 1], [], []>} : vector<8x256xbf16>, vector<256x128xbf16>, vector<8x128xf32> -> vector<8x128xf32>
    %c0_6 = arith.constant 0 : index
    %c0_7 = arith.constant 0 : index
    %6 = vector.load %arg4[%c0_6, %c0_7] : memref<1x128xf32, #tpu.memory_space<vmem>>, vector<1x128xf32>
    %7 = vector.broadcast %6 : vector<1x128xf32> to vector<8x128xf32>
    %8 = arith.addf %5, %7 : vector<8x128xf32>
    %cst_8 = arith.constant dense<0xFF800000> : vector<8xf32>
    %9 = vector.multi_reduction <maximumf>, %8, %cst_8 [1] : vector<8x128xf32> to vector<8xf32>
    %10 = vector.shape_cast %9 : vector<8xf32> to vector<8x1xf32>
    %11 = vector.broadcast %10 : vector<8x1xf32> to vector<8x128xf32>
    %12 = arith.subf %8, %11 : vector<8x128xf32>
    %13 = math.exp %12 : vector<8x128xf32>
    %cst_9 = arith.constant dense<0.000000e+00> : vector<8xf32>
    %14 = vector.multi_reduction <add>, %13, %cst_9 [1] : vector<8x128xf32> to vector<8xf32>
    %15 = vector.shape_cast %14 : vector<8xf32> to vector<8x1xf32>
    %16 = tpu.reciprocal %15 {approx = true} : vector<8x1xf32> -> vector<8x1xf32>
    %17 = vector.broadcast %16 : vector<8x1xf32> to vector<8x128xf32>
    %18 = arith.mulf %13, %17 : vector<8x128xf32>
    %19 = arith.truncf %18 : vector<8x128xf32> to vector<8x128xbf16>
    %c0_10 = arith.constant 0 : index
    %c0_11 = arith.constant 0 : index
    %20 = vector.load %arg1[%c0_10, %c0_11] : memref<128x128xbf16, #tpu.memory_space<vmem>>, vector<128x128xbf16>
    %cst_12 = arith.constant dense<0.000000e+00> : vector<8x128xf32>
    %21 = tpu.matmul %19, %20, %cst_12 {dimension_numbers = #tpu.dot_dimension_numbers<[1], [0], [0], [1], [0, 0, 1, 1], [], []>} : vector<8x128xbf16>, vector<128x128xbf16>, vector<8x128xf32> -> vector<8x128xf32>
    %c0_13 = arith.constant 0 : index
    %c0_14 = arith.constant 0 : index
    %22 = vector.load %arg6[%c0_13, %c0_14] : memref<8x128xf32, #tpu.memory_space<vmem>>, vector<8x128xf32>
    tpu.vector_store %arg6[%c0_13, %c0_14], %21 {strides = array<i32>} : memref<8x128xf32, #tpu.memory_space<vmem>>, vector<8x128xf32>,
    return
  }
  func.func @transform_0(%arg0: i32) -> (i32, i32) {
    %c0_i32 = arith.constant 0 : i32
    %c0_i32_0 = arith.constant 0 : i32
    %c0_i32_1 = arith.constant 0 : i32
    return %c0_i32, %c0_i32_0 : i32, i32
  }
  func.func @transform_1(%arg0: i32) -> (i32, i32) {
    %c0_i32 = arith.constant 0 : i32
    %c0_i32_0 = arith.constant 0 : i32
    %c0_i32_1 = arith.constant 0 : i32
    return %c0_i32, %c0_i32_0 : i32, i32
  }
  func.func @transform_2(%arg0: i32) -> (i32, i32) {
    %c0_i32 = arith.constant 0 : i32
    %c0_i32_0 = arith.constant 0 : i32
    %c0_i32_1 = arith.constant 0 : i32
    return %c0_i32, %c0_i32_0 : i32, i32
  }
  func.func @transform_3(%arg0: i32) -> (i32, i32) {
    %c0_i32 = arith.constant 0 : i32
    %c0_i32_0 = arith.constant 0 : i32
    %c0_i32_1 = arith.constant 0 : i32
    return %c0_i32, %c0_i32_0 : i32, i32
  }
  func.func @transform_4(%arg0: i32) -> (i32, i32) {
    %c0_i32 = arith.constant 0 : i32
    %c0_i32_0 = arith.constant 0 : i32
    return %arg0, %c0_i32 : i32, i32
  }
  func.func @transform_5(%arg0: i32) -> (i32, i32) {
    %c0_i32 = arith.constant 0 : i32
    %c0_i32_0 = arith.constant 0 : i32
    return %arg0, %c0_i32 : i32, i32
  }
}

</mosaic_0001>

<llo_original>
// kernel: tpu_custom_call.1
$region0: #{tpu_custom_call.1}
  #allocation0 [shape = 'u32[]', space=smem, size = 0x4, offset = 0x4, fixed_abs, tag = 'smem constant byte address 0x4 - core index']
  #allocation1 [shape = 'u32[144,128]{1,0:T(1,128)}', space=vmem, size = 0x12000, scoped, tag = 'internal scratch']
  %s0 = inlined_call_operand.hbm [shape: bf16[128,128], index: 0, kind: input, shape index: {}]
  %s1 = inlined_call_operand.hbm [shape: bf16[256,128], index: 1, kind: input, shape index: {}]
  %s2 = inlined_call_operand.hbm [shape: bf16[128,256], index: 2, kind: input, shape index: {}]
  %s3 = inlined_call_operand.vmem [shape: f32[1,128], index: 3, kind: input, shape index: {}]
  %s4 = inlined_call_operand.vmem [shape: bf16[8,128], index: 4, kind: input, shape index: {}]
  %s5 = inlined_call_operand.hbm [shape: f32[8,128], index: 5, kind: output, shape index: {}]
  %s6 = sld [smem:[#allocation0]]
  $region42: #{tpu_custom_call.1} parent=0
    _
  %s8 = ssub.s32 1, %s6
  %s9 = scalar_select 0, %s8, %s6
  $region1: #{tpu_custom_call.1} parent=0
    #allocation2 [shape = 'u8[32768]{0}', space=vmem, size = 0x8000, scoped, tag = 'input window, operand 0, single buffered']
    #allocation3 [shape = 's32[1]{0}', space=sflag, size = 0x4, scoped, tag = 'scoped memory for tpu_custom_call.1']
    #allocation4 [shape = 's32[1]{0}', space=sflag, size = 0x4, scoped, tag = 'scoped memory for tpu_custom_call.1']
    #allocation5 [shape = 'u8[65536]{0}', space=vmem, size = 0x10000, scoped, tag = 'input window, operand 1, single buffered']
    #allocation6 [shape = 's32[1]{0}', space=sflag, size = 0x4, scoped, tag = 'scoped memory for tpu_custom_call.1']
    #allocation7 [shape = 'u8[65536]{0}', space=vmem, size = 0x10000, scoped, tag = 'input window, operand 2, single buffered']
    #allocation8 [shape = 'u8[4096]{0}', space=vmem, size = 0x1000, scoped, tag = 'output window, operand 0, single buffered']
    %10 = vsyncpa [#allocation3], 0
    %11 = vsyncpa [#allocation6], 0
    %12 = vsyncpa [#allocation4], 0
    // Predicated region
    $region2: #{tpu_custom_call.1} parent=1 // pred_check
      _
    $region3: #{tpu_custom_call.1} parent=1 // pred_check_branch
      %14 = sbr.rel (0) target = $region5
    $region4: #{tpu_custom_call.1} parent=1 // pred_region
      %s16 = ssub.s32 1024, 1024
      %17 = vsyncadd [#allocation3], %s16
      %s18 = sshll.u32 [#allocation2], 4
      %s19 = int_to_ptr.vmem [resolvable:$true] %s18
      %24 = dma.hbm_to_vmem [thread:$0]  %s0, 1024, %s19, [#allocation3], 64, 64, 4
    $region5: #{tpu_custom_call.1} parent=1 // pred_fallthru
      _
    // Predicated region
    $region6: #{tpu_custom_call.1} parent=1 // pred_check
      _
    $region7: #{tpu_custom_call.1} parent=1 // pred_check_branch
      %26 = sbr.rel (0) target = $region9
    $region8: #{tpu_custom_call.1} parent=1 // pred_region
      %s28 = ssub.s32 2048, 2048
      %29 = vsyncadd [#allocation6], %s28
      %s30 = sshll.u32 [#allocation5], 4
      %s31 = int_to_ptr.vmem [resolvable:$true] %s30
      %36 = dma.hbm_to_vmem [thread:$0]  %s1, 2048, %s31, [#allocation6], 64, 64, 4
    $region9: #{tpu_custom_call.1} parent=1 // pred_fallthru
      _
    // Predicated region
    $region10: #{tpu_custom_call.1} parent=1 // pred_check
      _
    $region11: #{tpu_custom_call.1} parent=1 // pred_check_branch
      %38 = sbr.rel (0) target = $region13
    $region12: #{tpu_custom_call.1} parent=1 // pred_region
      %s40 = ssub.s32 2048, 2048
      %41 = vsyncadd [#allocation6], %s40
      %s42 = sshll.u32 [#allocation7], 4
      %s43 = int_to_ptr.vmem [resolvable:$true] %s42
      %48 = dma.hbm_to_vmem [thread:$0]  %s2, 2048, %s43, [#allocation6], 128, 128, 8
    $region13: #{tpu_custom_call.1} parent=1 // pred_fallthru
      _
    // Predicated region
    $region14: #{tpu_custom_call.1} parent=1 // pred_check
      _
    $region15: #{tpu_custom_call.1} parent=1 // pred_check_branch
      %50 = sbr.rel (0) target = $region17
    $region16: #{tpu_custom_call.1} parent=1 // pred_region
      _
    $region17: #{tpu_custom_call.1} parent=1 // pred_fallthru
      _
    // Predicated region
    $region18: #{tpu_custom_call.1} parent=1 // pred_check
      _
    $region19: #{tpu_custom_call.1} parent=1 // pred_check_branch
      %52 = sbr.rel (0) target = $region21
    $region20: #{tpu_custom_call.1} parent=1 // pred_region
      _
    $region21: #{tpu_custom_call.1} parent=1 // pred_fallthru
      _
    // Predicated region
    $region22: #{tpu_custom_call.1} parent=1 // pred_check
      _
    $region23: #{tpu_custom_call.1} parent=1 // pred_check_branch
      %54 = sbr.rel (0) target = $region25
    $region24: #{tpu_custom_call.1} parent=1 // pred_region
      %55 = dma.done [#allocation3], 1024
    $region25: #{tpu_custom_call.1} parent=1 // pred_fallthru
      _
    // Predicated region
    $region26: #{tpu_custom_call.1} parent=1 // pred_check
      _
    $region27: #{tpu_custom_call.1} parent=1 // pred_check_branch
      %57 = sbr.rel (0) target = $region29
    $region28: #{tpu_custom_call.1} parent=1 // pred_region
      %58 = dma.done [#allocation6], 2048
    $region29: #{tpu_custom_call.1} parent=1 // pred_fallthru
      _
    // Predicated region
    $region30: #{tpu_custom_call.1} parent=1 // pred_check
      _
    $region31: #{tpu_custom_call.1} parent=1 // pred_check_branch
      %60 = sbr.rel (0) target = $region33
    $region32: #{tpu_custom_call.1} parent=1 // pred_region
      %61 = dma.done [#allocation6], 2048
    $region33: #{tpu_custom_call.1} parent=1 // pred_fallthru
      _
    %v63 = vld [vmem:[%s4] sm:$0xf]
    %v64 = vld [vmem:[#allocation7] sm:$0xff]
    %v65 = vld [vmem:[#allocation7 + $0x8] sm:$0xff]
    %v66 = vld [vmem:[#allocation7 + $0x10] sm:$0xff]
    %v67 = vld [vmem:[#allocation7 + $0x18] sm:$0xff]
    %v68 = vld [vmem:[#allocation7 + $0x20] sm:$0xff]
    %v69 = vld [vmem:[#allocation7 + $0x28] sm:$0xff]
    %v70 = vld [vmem:[#allocation7 + $0x30] sm:$0xff]
    %v71 = vld [vmem:[#allocation7 + $0x38] sm:$0xff]
    %v72 = vld [vmem:[#allocation7 + $0x40] sm:$0xff]
    %v73 = vld [vmem:[#allocation7 + $0x48] sm:$0xff]
    %v74 = vld [vmem:[#allocation7 + $0x50] sm:$0xff]
    %v75 = vld [vmem:[#allocation7 + $0x58] sm:$0xff]
    %v76 = vld [vmem:[#allocation7 + $0x60] sm:$0xff]
    %v77 = vld [vmem:[#allocation7 + $0x68] sm:$0xff]
    %v78 = vld [vmem:[#allocation7 + $0x70] sm:$0xff]
    %v79 = vld [vmem:[#allocation7 + $0x78] sm:$0xff]
    %v96 = vunpack.c.l.b16 %v64
    %v97 = vunpack.c.h.b16 %v64
    %v98 = vunpack.c.l.b16 %v65
    %v99 = vunpack.c.h.b16 %v65
    %v100 = vunpack.c.l.b16 %v66
    %v101 = vunpack.c.h.b16 %v66
    %v102 = vunpack.c.l.b16 %v67
    %v103 = vunpack.c.h.b16 %v67
    %v104 = vunpack.c.l.b16 %v68
    %v105 = vunpack.c.h.b16 %v68
    %v106 = vunpack.c.l.b16 %v69
    %v107 = vunpack.c.h.b16 %v69
    %v108 = vunpack.c.l.b16 %v70
    %v109 = vunpack.c.h.b16 %v70
    %v110 = vunpack.c.l.b16 %v71
    %v111 = vunpack.c.h.b16 %v71
    %v112 = vunpack.c.l.b16 %v72
    %v113 = vunpack.c.h.b16 %v72
    %v114 = vunpack.c.l.b16 %v73
    %v115 = vunpack.c.h.b16 %v73
    %v116 = vunpack.c.l.b16 %v74
    %v117 = vunpack.c.h.b16 %v74
    %v118 = vunpack.c.l.b16 %v75
    %v119 = vunpack.c.h.b16 %v75
    %v120 = vunpack.c.l.b16 %v76
    %v121 = vunpack.c.h.b16 %v76
    %v122 = vunpack.c.l.b16 %v77
    %v123 = vunpack.c.h.b16 %v77
    %v124 = vunpack.c.l.b16 %v78
    %v125 = vunpack.c.h.b16 %v78
    %v126 = vunpack.c.l.b16 %v79
    %v127 = vunpack.c.h.b16 %v79
    %v128 = vpack.c.b16 %v98, %v96
    %v129 = vpack.c.b16 %v99, %v97
    %v130 = vpack.c.b16 %v102, %v100
    %v131 = vpack.c.b16 %v103, %v101
    %v132 = vpack.c.b16 %v106, %v104
    %v133 = vpack.c.b16 %v107, %v105
    %v134 = vpack.c.b16 %v110, %v108
    %v135 = vpack.c.b16 %v111, %v109
    %v136 = vpack.c.b16 %v114, %v112
    %v137 = vpack.c.b16 %v115, %v113
    %v138 = vpack.c.b16 %v118, %v116
    %v139 = vpack.c.b16 %v119, %v117
    %v140 = vpack.c.b16 %v122, %v120
    %v141 = vpack.c.b16 %v123, %v121
    %v142 = vpack.c.b16 %v126, %v124
    %v143 = vpack.c.b16 %v127, %v125
    %160 = vmatprep.subr.bf16.mxu0 %v143
    %161 = vmatpush1.bf16.msra.mxu0 %v142
    %162 = vmatprep.subr.bf16.mxu0 %v141
    %163 = vmatpush1.bf16.msra.mxu0 %v140
    %164 = vmatprep.subr.bf16.mxu0 %v139
    %165 = vmatpush1.bf16.msra.mxu0 %v138
    %166 = vmatprep.subr.bf16.mxu0 %v137
    %167 = vmatpush1.bf16.msra.mxu0 %v136
    %168 = vmatprep.subr.bf16.mxu0 %v135
    %169 = vmatpush1.bf16.msra.mxu0 %v134
    %170 = vmatprep.subr.bf16.mxu0 %v133
    %171 = vmatpush1.bf16.msra.mxu0 %v132
    %172 = vmatprep.subr.bf16.mxu0 %v131
    %173 = vmatpush1.bf16.msra.mxu0 %v130
    %174 = vmatprep.subr.bf16.mxu0 %v129
    %175 = vmatpush1.bf16.msra.mxu0 %v128
    %176 = vmatprep.subr.bf16.mxu0 0
    %177 = vmatpush2.bf16.msra.mxu0 0
    %178 = vmatprep.subr.bf16.mxu0 0
    %179 = vmatpush2.bf16.msra.mxu0 0
    %180 = vmatprep.subr.bf16.mxu0 0
    %181 = vmatpush2.bf16.msra.mxu0 0
    %182 = vmatprep.subr.bf16.mxu0 0
    %183 = vmatpush2.bf16.msra.mxu0 0
    %184 = vmatprep.subr.bf16.mxu0 0
    %185 = vmatpush2.bf16.msra.mxu0 0
    %186 = vmatprep.subr.bf16.mxu0 0
    %187 = vmatpush2.bf16.msra.mxu0 0
    %188 = vmatprep.subr.bf16.mxu0 0
    %189 = vmatpush2.bf16.msra.mxu0 0
    %190 = vmatprep.subr.bf16.mxu0 0
    %191 = vmatpush2.bf16.msra.mxu0 0
    %192 = vmatprep.mubr.bf16.mxu0 0
    %193 = vmatmul.mubr.bf16.gmra.mxu0 %v63
    %v194 = vpop.f32.mrf.mxu0
    %v195 = vadd.f32 0.0, %v194
    %v196 = vpop.f32.mrf.mxu0
    %v197 = vadd.f32 0.0, %v196
    %v198 = vpop.f32.mrf.mxu0
    %v199 = vpop.f32.mrf.mxu0
    %200 = vdwg.mxu0
    %v201 = vpack.c.bf16 %v195, %v195
    %v202 = vpack.c.bf16 %v197, %v197
    %v203 = vld [vmem:[#allocation5] sm:$0xf]
    %v204 = vld [vmem:[#allocation5 + $0x4] sm:$0xf]
    %v205 = vld [vmem:[#allocation5 + $0x8] sm:$0xf]
    %v206 = vld [vmem:[#allocation5 + $0xc] sm:$0xf]
    %v207 = vld [vmem:[#allocation5 + $0x10] sm:$0xf]
    %v208 = vld [vmem:[#allocation5 + $0x14] sm:$0xf]
    %v209 = vld [vmem:[#allocation5 + $0x18] sm:$0xf]
    %v210 = vld [vmem:[#allocation5 + $0x1c] sm:$0xf]
    %v211 = vld [vmem:[#allocation5 + $0x20] sm:$0xf]
    %v212 = vld [vmem:[#allocation5 + $0x24] sm:$0xf]
    %v213 = vld [vmem:[#allocation5 + $0x28] sm:$0xf]
    %v214 = vld [vmem:[#allocation5 + $0x2c] sm:$0xf]
    %v215 = vld [vmem:[#allocation5 + $0x30] sm:$0xf]
    %v216 = vld [vmem:[#allocation5 + $0x34] sm:$0xf]
    %v217 = vld [vmem:[#allocation5 + $0x38] sm:$0xf]
    %v218 = vld [vmem:[#allocation5 + $0x3c] sm:$0xf]
    %v219 = vld [vmem:[#allocation5 + $0x40] sm:$0xf]
    %v220 = vld [vmem:[#allocation5 + $0x44] sm:$0xf]
    %v221 = vld [vmem:[#allocation5 + $0x48] sm:$0xf]
    %v222 = vld [vmem:[#allocation5 + $0x4c] sm:$0xf]
    %v223 = vld [vmem:[#allocation5 + $0x50] sm:$0xf]
    %v224 = vld [vmem:[#allocation5 + $0x54] sm:$0xf]
    %v225 = vld [vmem:[#allocation5 + $0x58] sm:$0xf]
    %v226 = vld [vmem:[#allocation5 + $0x5c] sm:$0xf]
    %v227 = vld [vmem:[#allocation5 + $0x60] sm:$0xf]
    %v228 = vld [vmem:[#allocation5 + $0x64] sm:$0xf]
    %v229 = vld [vmem:[#allocation5 + $0x68] sm:$0xf]
    %v230 = vld [vmem:[#allocation5 + $0x6c] sm:$0xf]
    %v231 = vld [vmem:[#allocation5 + $0x70] sm:$0xf]
    %v232 = vld [vmem:[#allocation5 + $0x74] sm:$0xf]
    %v233 = vld [vmem:[#allocation5 + $0x78] sm:$0xf]
    %v234 = vld [vmem:[#allocation5 + $0x7c] sm:$0xf]
    %v235 = vld [vmem:[%s3] sm:$0x1]
    %v237 = vlaneseq
    %v238 = vshrl.u32 %v237, 7
    %v239 = vsub.s32 0, %v238
    %v240 = vrot.slane %v235, %v239
    %v274 = vunpack.c.l.b16 %v203
    %v275 = vunpack.c.l.b16 %v204
    %v276 = vunpack.c.l.b16 %v205
    %v277 = vunpack.c.l.b16 %v206
    %v278 = vunpack.c.l.b16 %v207
    %v279 = vunpack.c.l.b16 %v208
    %v280 = vunpack.c.l.b16 %v209
    %v281 = vunpack.c.l.b16 %v210
    %v282 = vunpack.c.l.b16 %v211
    %v283 = vunpack.c.l.b16 %v212
    %v284 = vunpack.c.l.b16 %v213
    %v285 = vunpack.c.l.b16 %v214
    %v286 = vunpack.c.l.b16 %v215
    %v287 = vunpack.c.l.b16 %v216
    %v288 = vunpack.c.l.b16 %v217
    %v289 = vunpack.c.l.b16 %v218
    %v290 = vunpack.c.l.b16 %v219
    %v291 = vunpack.c.l.b16 %v220
    %v292 = vunpack.c.l.b16 %v221
    %v293 = vunpack.c.l.b16 %v222
    %v294 = vunpack.c.l.b16 %v223
    %v295 = vunpack.c.l.b16 %v224
    %v296 = vunpack.c.l.b16 %v225
    %v297 = vunpack.c.l.b16 %v226
    %v298 = vunpack.c.l.b16 %v227
    %v299 = vunpack.c.l.b16 %v228
    %v300 = vunpack.c.l.b16 %v229
    %v301 = vunpack.c.l.b16 %v230
    %v302 = vunpack.c.l.b16 %v231
    %v303 = vunpack.c.l.b16 %v232
    %v304 = vunpack.c.l.b16 %v233
    %v305 = vunpack.c.l.b16 %v234
    %v306 = vpack.c.b16 %v275, %v274
    %v307 = vpack.c.b16 %v277, %v276
    %v308 = vpack.c.b16 %v279, %v278
    %v309 = vpack.c.b16 %v281, %v280
    %v310 = vpack.c.b16 %v283, %v282
    %v311 = vpack.c.b16 %v285, %v284
    %v312 = vpack.c.b16 %v287, %v286
    %v313 = vpack.c.b16 %v289, %v288
    %v314 = vpack.c.b16 %v291, %v290
    %v315 = vpack.c.b16 %v293, %v292
    %v316 = vpack.c.b16 %v295, %v294
    %v317 = vpack.c.b16 %v297, %v296
    %v318 = vpack.c.b16 %v299, %v298
    %v319 = vpack.c.b16 %v301, %v300
    %v320 = vpack.c.b16 %v303, %v302
    %v321 = vpack.c.b16 %v305, %v304
    %338 = vmatprep.subr.bf16.mxu0 0
    %339 = vmatpush1.bf16.msra.mxu0 %v313
    %340 = vmatprep.subr.bf16.mxu0 0
    %341 = vmatpush1.bf16.msra.mxu0 %v312
    %342 = vmatprep.subr.bf16.mxu0 0
    %343 = vmatpush1.bf16.msra.mxu0 %v311
    %344 = vmatprep.subr.bf16.mxu0 0
    %345 = vmatpush1.bf16.msra.mxu0 %v310
    %346 = vmatprep.subr.bf16.mxu0 0
    %347 = vmatpush1.bf16.msra.mxu0 %v309
    %348 = vmatprep.subr.bf16.mxu0 0
    %349 = vmatpush1.bf16.msra.mxu0 %v308
    %350 = vmatprep.subr.bf16.mxu0 0
    %351 = vmatpush1.bf16.msra.mxu0 %v307
    %352 = vmatprep.subr.bf16.mxu0 0
    %353 = vmatpush1.bf16.msra.mxu0 %v306
    %354 = vmatprep.subr.bf16.mxu0 0
    %355 = vmatpush2.bf16.msra.mxu0 %v321
    %356 = vmatprep.subr.bf16.mxu0 0
    %357 = vmatpush2.bf16.msra.mxu0 %v320
    %358 = vmatprep.subr.bf16.mxu0 0
    %359 = vmatpush2.bf16.msra.mxu0 %v319
    %360 = vmatprep.subr.bf16.mxu0 0
    %361 = vmatpush2.bf16.msra.mxu0 %v318
    %362 = vmatprep.subr.bf16.mxu0 0
    %363 = vmatpush2.bf16.msra.mxu0 %v317
    %364 = vmatprep.subr.bf16.mxu0 0
    %365 = vmatpush2.bf16.msra.mxu0 %v316
    %366 = vmatprep.subr.bf16.mxu0 0
    %367 = vmatpush2.bf16.msra.mxu0 %v315
    %368 = vmatprep.subr.bf16.mxu0 0
    %369 = vmatpush2.bf16.msra.mxu0 %v314
    %370 = vmatprep.mubr.bf16.mxu0 %v202
    %371 = vmatmul.mubr.bf16.gmra.mxu0 %v201
    %v372 = vpop.f32.mrf.mxu0
    %v373 = vadd.f32 %v240, %v372
    %v374 = vpop.f32.mrf.mxu0
    %v375 = vpop.f32.mrf.mxu0
    %v376 = vpop.f32.mrf.mxu0
    %377 = vdwg.mxu0
    %378 = vmax.xlane.f32.xlu0 %v373
    %v379 = vpop.xlane.xlu0 %378
    %v380 = vsub.f32 %v373, %v379
    %v381 = vmul.f32 %v380, 1.442695
    %v382 = vpow.pop %v381
    %383 = vadd.xlane.f32.xlu0 %v382
    %v384 = vpop.xlane.xlu0 %383
    %v385 = vrcp.pop %v384
    %v386 = vmul.f32 %v382, %v385
    %v387 = vpack.c.bf16 %v386, %v386
    %v388 = vld [vmem:[#allocation2] sm:$0xf]
    %v389 = vld [vmem:[#allocation2 + $0x4] sm:$0xf]
    %v390 = vld [vmem:[#allocation2 + $0x8] sm:$0xf]
    %v391 = vld [vmem:[#allocation2 + $0xc] sm:$0xf]
    %v392 = vld [vmem:[#allocation2 + $0x10] sm:$0xf]
    %v393 = vld [vmem:[#allocation2 + $0x14] sm:$0xf]
    %v394 = vld [vmem:[#allocation2 + $0x18] sm:$0xf]
    %v395 = vld [vmem:[#allocation2 + $0x1c] sm:$0xf]
    %v396 = vld [vmem:[#allocation2 + $0x20] sm:$0xf]
    %v397 = vld [vmem:[#allocation2 + $0x24] sm:$0xf]
    %v398 = vld [vmem:[#allocation2 + $0x28] sm:$0xf]
    %v399 = vld [vmem:[#allocation2 + $0x2c] sm:$0xf]
    %v400 = vld [vmem:[#allocation2 + $0x30] sm:$0xf]
    %v401 = vld [vmem:[#allocation2 + $0x34] sm:$0xf]
    %v402 = vld [vmem:[#allocation2 + $0x38] sm:$0xf]
    %v403 = vld [vmem:[#allocation2 + $0x3c] sm:$0xf]
    %v420 = vunpack.c.l.b16 %v388
    %v421 = vunpack.c.l.b16 %v389
    %v422 = vunpack.c.l.b16 %v390
    %v423 = vunpack.c.l.b16 %v391
    %v424 = vunpack.c.l.b16 %v392
    %v425 = vunpack.c.l.b16 %v393
    %v426 = vunpack.c.l.b16 %v394
    %v427 = vunpack.c.l.b16 %v395
    %v428 = vunpack.c.l.b16 %v396
    %v429 = vunpack.c.l.b16 %v397
    %v430 = vunpack.c.l.b16 %v398
    %v431 = vunpack.c.l.b16 %v399
    %v432 = vunpack.c.l.b16 %v400
    %v433 = vunpack.c.l.b16 %v401
    %v434 = vunpack.c.l.b16 %v402
    %v435 = vunpack.c.l.b16 %v403
    %v436 = vpack.c.b16 %v421, %v420
    %v437 = vpack.c.b16 %v423, %v422
    %v438 = vpack.c.b16 %v425, %v424
    %v439 = vpack.c.b16 %v427, %v426
    %v440 = vpack.c.b16 %v429, %v428
    %v441 = vpack.c.b16 %v431, %v430
    %v442 = vpack.c.b16 %v433, %v432
    %v443 = vpack.c.b16 %v435, %v434
    %452 = vmatprep.subr.bf16.mxu0 0
    %453 = vmatpush1.bf16.msra.mxu0 %v443
    %454 = vmatprep.subr.bf16.mxu0 0
    %455 = vmatpush1.bf16.msra.mxu0 %v442
    %456 = vmatprep.subr.bf16.mxu0 0
    %457 = vmatpush1.bf16.msra.mxu0 %v441
    %458 = vmatprep.subr.bf16.mxu0 0
    %459 = vmatpush1.bf16.msra.mxu0 %v440
    %460 = vmatprep.subr.bf16.mxu0 0
    %461 = vmatpush1.bf16.msra.mxu0 %v439
    %462 = vmatprep.subr.bf16.mxu0 0
    %463 = vmatpush1.bf16.msra.mxu0 %v438
    %464 = vmatprep.subr.bf16.mxu0 0
    %465 = vmatpush1.bf16.msra.mxu0 %v437
    %466 = vmatprep.subr.bf16.mxu0 0
    %467 = vmatpush1.bf16.msra.mxu0 %v436
    %468 = vmatprep.subr.bf16.mxu0 0
    %469 = vmatpush2.bf16.msra.mxu0 0
    %470 = vmatprep.subr.bf16.mxu0 0
    %471 = vmatpush2.bf16.msra.mxu0 0
    %472 = vmatprep.subr.bf16.mxu0 0
    %473 = vmatpush2.bf16.msra.mxu0 0
    %474 = vmatprep.subr.bf16.mxu0 0
    %475 = vmatpush2.bf16.msra.mxu0 0
    %476 = vmatprep.subr.bf16.mxu0 0
    %477 = vmatpush2.bf16.msra.mxu0 0
    %478 = vmatprep.subr.bf16.mxu0 0
    %479 = vmatpush2.bf16.msra.mxu0 0
    %480 = vmatprep.subr.bf16.mxu0 0
    %481 = vmatpush2.bf16.msra.mxu0 0
    %482 = vmatprep.subr.bf16.mxu0 0
    %483 = vmatpush2.bf16.msra.mxu0 0
    %484 = vmatprep.mubr.bf16.mxu0 0
    %485 = vmatmul.mubr.bf16.gmra.mxu0 %v387
    %v486 = vpop.f32.mrf.mxu0
    %v487 = vadd.f32 0.0, %v486
    %v488 = vpop.f32.mrf.mxu0
    %v489 = vpop.f32.mrf.mxu0
    %v490 = vpop.f32.mrf.mxu0
    %491 = vdwg.mxu0
    %492 = vst [vmem:[#allocation8] sm:$0xff] %v487
    // Predicated region
    $region34: #{tpu_custom_call.1} parent=1 // pred_check
      _
    $region35: #{tpu_custom_call.1} parent=1 // pred_check_branch
      %494 = sbr.rel (0) target = $region37
    $region36: #{tpu_custom_call.1} parent=1 // pred_region
      %s496 = ssub.s32 128, 128
      %497 = vsyncadd [#allocation4], %s496
      %s499 = sshll.u32 [#allocation8], 4
      %s500 = int_to_ptr.vmem [resolvable:$true] %s499
      %502 = dma.vmem_to_hbm [thread:$0]  %s500, 128, %s5, [#allocation4]
    $region37: #{tpu_custom_call.1} parent=1 // pred_fallthru
      _
    // Predicated region
    $region38: #{tpu_custom_call.1} parent=1 // pred_check
      _
    $region39: #{tpu_custom_call.1} parent=1 // pred_check_branch
      %504 = sbr.rel (0) target = $region41
    $region40: #{tpu_custom_call.1} parent=1 // pred_region
      %505 = dma.done [#allocation4], 128
    $region41: #{tpu_custom_call.1} parent=1 // pred_fallthru
      _
    %506 = vsyncpa [#allocation3], 1
    %507 = vsyncpa [#allocation6], 1
    %508 = vsyncpa [#allocation4], 1

</llo_original>
